<compile_context>
chip_gen: v7x
topology: tpu7x:2x2x1
jax: 0.10.0
libtpu: 0.0.40
codegen_flags: <defaults>
</compile_context>

<pallas_src>
import functools

import jax
import jax.numpy as jnp
from jax.experimental import pallas as pl
from jax.experimental.pallas import tpu as pltpu

EMBED_DIM = 60      # Conv1d in_channels, dense2 out_features
DENSE_DIM = 64      # dense1 width (folded into Weff in the wrapper)
CONV_OUT = 60       # Conv1d out_channels
SEQ_LEN = EMBED_DIM  # forward only type-checks when L == 60
CHUNK = 8           # batch rows per inner-loop iteration


def _round_up(x, m):
    return (x + m - 1) // m * m


def cnn_kernel(x_ref, wcb_ref, weffb_ref, bias_ref, o_ref):
    """One grid step: (bb, 60, 60) activation block -> (bb, 60, 60) output block.

    x_ref    : (bb, C, L)  activations, compute dtype (= x.dtype)
    wcb_ref  : (bc, O, C)  conv weight (k=1), pre-broadcast to chunk size bc
    weffb_ref: (bc, L, E)  fused dense1 @ dense2 weight, pre-broadcast
    bias_ref : (O, E)      fused (conv + dense1 + dense2) bias, float32
    o_ref    : (bb, O, E)  output block
    """
    bb = x_ref.shape[0]
    bc = wcb_ref.shape[0]

    # Weights/bias are pinned in VMEM (constant index_map -> DMAed once per
    # core); load them once, hoisted out of the chunk loop.
    wcb = wcb_ref[...]
    weffb = weffb_ref[...]
    bias = bias_ref[...][None]          # (1, O, E) float32

    def chunk_body(i, carry):
        start = pl.multiple_of(i * bc, bc)
        x = x_ref[pl.ds(start, bc), :, :]                        # (bc, C, L)
        # Conv1d(kernel_size=1) == per-example channel matmul.  Canonical
        # batched GEMM (batch dims on both operands), f32 accumulation on MXU.
        y = jnp.einsum("boc,bcl->bol", wcb, x,
                       preferred_element_type=jnp.float32)       # (bc, O, L)
        y = y.astype(x.dtype)
        # dense2(dense1(.)) fused into a single 60x60 weight on the last dim,
        # plus one fused bias add (conv + dense1 + dense2 biases).
        out = jnp.einsum("bol,ble->boe", y, weffb,
                         preferred_element_type=jnp.float32)     # (bc, O, E)
        out = out + bias
        o_ref[pl.ds(start, bc), :, :] = out.astype(o_ref.dtype)
        return carry

    jax.lax.fori_loop(0, bb // bc, chunk_body, 0)


@functools.partial(jax.jit, static_argnames=("block_batch", "chunk", "out_dtype"))
def cnn_forward(x, params, *, block_batch=None, chunk=CHUNK, out_dtype=None):
    """x: (N, 60, 60), any float dtype (bf16 recommended for HBM-bound use).

    params: dict of conv/dense weights in PyTorch shapes (see init_params).
    """
    N, C, L = x.shape
    if C != EMBED_DIM or L != SEQ_LEN:
        raise ValueError("forward requires x of shape (N, 60, 60)")
    f32 = jnp.float32
    cd = x.dtype                        # compute dtype follows the activations
    if out_dtype is None:
        out_dtype = x.dtype

    # ---- tiny wrapper-side weight algebra (60x60 matrices / 60-vectors) ------
    wc = params["conv_w"][:, :, 0].astype(f32)                 # (O, C)
    bconv = params["conv_b"].astype(f32)                       # (O,)
    w1t = params["dense1_w"].T.astype(f32)                     # (L, D)
    b1 = params["dense1_b"].astype(f32)                        # (D,)
    w2t = params["dense2_w"].T.astype(f32)                     # (D, E)
    b2 = params["dense2_b"].astype(f32)                        # (E,)
    # Exact (real-arithmetic) fusion of dense1/dense2 and all biases:
    #   out = (Wc @ x) @ Weff + [outer(bconv, colsum(Weff)) + b1 @ W2t + b2]
    weff = w1t @ w2t                                           # (L, E)
    bias = (bconv[:, None] * jnp.sum(weff, axis=0)[None, :]
            + (b1 @ w2t + b2)[None, :])                        # (O, E) f32

    # ---- block sizing ---------------------------------------------------------
    in_item = jnp.dtype(cd).itemsize
    out_item = jnp.dtype(out_dtype).itemsize
    if block_batch is None:
        # bf16 blocks are half the VMEM, so they can be twice as long.
        block_batch = 256 if in_item <= 2 else 128
    if N <= chunk:
        bb = bc = N                      # exact single block for tiny batches
    else:
        bc = chunk
        # Cap bb near N/4 so the grid has several steps (v7x runs the "parallel"
        # batch axis on both TensorCores) and the partial tail stays small.
        target = max(bc, _round_up(-(-N // 4), bc))
        bb = _round_up(min(block_batch, target), bc)
    grid = (pl.cdiv(N, bb),)

    # Weights pre-broadcast ONCE to the chunk size (tiny: bc x 60 x 60); they are
    # pinned in VMEM by constant index_maps, so no per-step broadcast_in_dim.
    wcb = jnp.broadcast_to(wc.astype(cd)[None], (bc, CONV_OUT, EMBED_DIM))
    weffb = jnp.broadcast_to(weff.astype(cd)[None], (bc, SEQ_LEN, EMBED_DIM))

    # VMEM: each (bb, 60, 60) block buffer occupies bb * 64 * 128 elements
    # (sublane/lane tile padding); in + out, double-buffered, plus margin.
    buf_elems = bb * 64 * 128
    vmem_limit = int(min(64 * 2**20,
                         max(32 * 2**20,
                             2 * buf_elems * (in_item + out_item) + 16 * 2**20)))

    out = pl.pallas_call(
        cnn_kernel,
        out_shape=jax.ShapeDtypeStruct((N, CONV_OUT, EMBED_DIM), out_dtype),
        grid_spec=pltpu.PrefetchScalarGridSpec(
            num_scalar_prefetch=0,
            grid=grid,
            in_specs=[
                pl.BlockSpec((bb, C, L), lambda n: (n, 0, 0)),
                pl.BlockSpec((bc, CONV_OUT, EMBED_DIM), lambda n: (0, 0, 0)),
                pl.BlockSpec((bc, SEQ_LEN, EMBED_DIM), lambda n: (0, 0, 0)),
                pl.BlockSpec((CONV_OUT, EMBED_DIM), lambda n: (0, 0)),
            ],
            out_specs=pl.BlockSpec((bb, CONV_OUT, EMBED_DIM), lambda n: (n, 0, 0)),
        ),
        compiler_params=pltpu.CompilerParams(
            # Batch blocks are independent -> shardable across TensorCores (v7x).
            dimension_semantics=("parallel",),
            vmem_limit_bytes=vmem_limit,
        ),
    )(x, wcb, weffb, bias)
    return out


def cnn_reference(x, params):
    """Unfused pure-JAX reference matching the PyTorch forward."""
    wc = params["conv_w"][:, :, 0]
    y = jnp.einsum("oc,ncl->nol", wc, x) + params["conv_b"][None, :, None]
    z = jnp.einsum("nol,dl->nod", y, params["dense1_w"]) + params["dense1_b"]
    out = jnp.einsum("nod,ed->noe", z, params["dense2_w"]) + params["dense2_b"]
    return out


def init_params(key):
    ks = jax.random.split(key, 6)
    scale = 0.05
    # TODO(synk): self.embedding (Linear 60->60) and self.pool (AvgPool1d(3)) are
    # unused in the PyTorch forward, so they are intentionally not materialized.
    return {
        # PyTorch shapes: Conv1d weight (out, in, k), Linear weight (out, in)
        "conv_w": scale * jax.random.normal(ks[0], (CONV_OUT, EMBED_DIM, 1), jnp.float32),
        "conv_b": scale * jax.random.normal(ks[1], (CONV_OUT,), jnp.float32),
        "dense1_w": scale * jax.random.normal(ks[2], (DENSE_DIM, CONV_OUT), jnp.float32),
        "dense1_b": scale * jax.random.normal(ks[3], (DENSE_DIM,), jnp.float32),
        "dense2_w": scale * jax.random.normal(ks[4], (EMBED_DIM, DENSE_DIM), jnp.float32),
        "dense2_b": scale * jax.random.normal(ks[5], (EMBED_DIM,), jnp.float32),
    }


if __name__ == "__main__":
    key = jax.random.PRNGKey(0)
    pkey, xkey, xkey2 = jax.random.split(key, 3)
    params = init_params(pkey)

    # Small test matching the module's forward: batch=2, channels=60, length=60.
    x = jax.random.normal(xkey, (2, EMBED_DIM, SEQ_LEN), jnp.float32)
    out = jax.block_until_ready(cnn_forward(x, params))
    ref = cnn_reference(x, params)
    assert out.shape == (2, CONV_OUT, EMBED_DIM)
    assert jnp.allclose(out, ref, atol=1e-4, rtol=1e-4), "f32 mismatch vs reference"

    # Larger batch: multi-block grid + un-padded partial tail block (130 % 40 != 0).
    xb = jax.random.normal(xkey2, (130, EMBED_DIM, SEQ_LEN), jnp.float32)
    outb = jax.block_until_ready(cnn_forward(xb, params))
    refb = cnn_reference(xb, params)
    assert jnp.allclose(outb, refb, atol=1e-4, rtol=1e-4), "f32 batched mismatch"

    # bf16 HBM path (halves input + output DMA).  Looser tolerance: dense1/dense2
    # fusion + bf16 rounding differ from the sequential f32 reference.
    xb16 = xb.astype(jnp.bfloat16)
    outb16 = jax.block_until_ready(cnn_forward(xb16, params))
    assert outb16.dtype == jnp.bfloat16
    assert jnp.allclose(outb16.astype(jnp.float32), refb, atol=3e-2, rtol=5e-2), \
        "bf16 mismatch vs reference"

    print("KERNEL_OK")
</pallas_src>

<mosaic_0001>
module attributes {stable_mosaic.version = 11 : i64} {
  func.func @cnn_kernel(%arg0: i32, %arg1: memref<2x60x60xf32, #tpu.memory_space<vmem>>, %arg2: memref<2x60x60xf32, #tpu.memory_space<vmem>>, %arg3: memref<2x60x60xf32, #tpu.memory_space<vmem>>, %arg4: memref<60x60xf32, #tpu.memory_space<vmem>>, %arg5: memref<2x60x60xf32, #tpu.memory_space<vmem>>) attributes {dimension_semantics = [#tpu.dimension_semantics<parallel>], iteration_bounds = array<i64: 1>, scalar_prefetch = 0 : i64, scratch_operands = 0 : i64, tpu.core_type = #tpu.core_type<tc>, window_params = [{transform_indices = @transform_0, window_bounds = array<i64: 2, 60, 60>}, {pipeline_mode = #tpu.pipeline_mode<synchronous>, transform_indices = @transform_1, window_bounds = array<i64: 2, 60, 60>}, {pipeline_mode = #tpu.pipeline_mode<synchronous>, transform_indices = @transform_2, window_bounds = array<i64: 2, 60, 60>}, {pipeline_mode = #tpu.pipeline_mode<synchronous>, transform_indices = @transform_3, window_bounds = array<i64: 60, 60>}, {transform_indices = @transform_4, window_bounds = array<i64: 2, 60, 60>}]} {
    %c0 = arith.constant 0 : index
    %c0_0 = arith.constant 0 : index
    %c0_1 = arith.constant 0 : index
    %0 = vector.load %arg2[%c0, %c0_0, %c0_1] : memref<2x60x60xf32, #tpu.memory_space<vmem>>, vector<2x60x60xf32>
    %c0_2 = arith.constant 0 : index
    %c0_3 = arith.constant 0 : index
    %c0_4 = arith.constant 0 : index
    %1 = vector.load %arg3[%c0_2, %c0_3, %c0_4] : memref<2x60x60xf32, #tpu.memory_space<vmem>>, vector<2x60x60xf32>
    %c0_5 = arith.constant 0 : index
    %c0_6 = arith.constant 0 : index
    %2 = vector.load %arg4[%c0_5, %c0_6] : memref<60x60xf32, #tpu.memory_space<vmem>>, vector<60x60xf32>
    %3 = vector.shape_cast %2 : vector<60x60xf32> to vector<1x60x60xf32>
    %c0_i32 = arith.constant 0 : i32
    %c2_i32 = arith.constant 2 : i32
    %4 = arith.muli %c0_i32, %c2_i32 : i32
    %5 = tpu.assume_multiple %4, 2 : i32
    %6 = arith.index_cast %5 : i32 to index
    %c0_7 = arith.constant 0 : index
    %c0_8 = arith.constant 0 : index
    %7 = vector.load %arg1[%6, %c0_7, %c0_8] : memref<2x60x60xf32, #tpu.memory_space<vmem>>, vector<2x60x60xf32>
    "tpu.trace_start"() <{level = 10 : i32, message = "boc,bcl->bol"}> : () -> ()
    %cst = arith.constant dense<0.000000e+00> : vector<2x60x60xf32>
    %8 = tpu.matmul %0, %7, %cst {dimension_numbers = #tpu.dot_dimension_numbers<[2], [1], [1], [2], [0, 0, 0, 1, 1, 2], [0], [0]>} : vector<2x60x60xf32>, vector<2x60x60xf32>, vector<2x60x60xf32> -> vector<2x60x60xf32>
    "tpu.trace_stop"() : () -> ()
    "tpu.trace_start"() <{level = 10 : i32, message = "bol,ble->boe"}> : () -> ()
    %cst_9 = arith.constant dense<0.000000e+00> : vector<2x60x60xf32>
    %9 = tpu.matmul %8, %1, %cst_9 {dimension_numbers = #tpu.dot_dimension_numbers<[2], [1], [1], [2], [0, 0, 0, 1, 1, 2], [0], [0]>} : vector<2x60x60xf32>, vector<2x60x60xf32>, vector<2x60x60xf32> -> vector<2x60x60xf32>
    "tpu.trace_stop"() : () -> ()
    %10 = vector.broadcast %3 : vector<1x60x60xf32> to vector<2x60x60xf32>
    %11 = arith.addf %9, %10 : vector<2x60x60xf32>
    %12 = arith.index_cast %5 : i32 to index
    %c0_10 = arith.constant 0 : index
    %c0_11 = arith.constant 0 : index
    %13 = vector.load %arg5[%12, %c0_10, %c0_11] : memref<2x60x60xf32, #tpu.memory_space<vmem>>, vector<2x60x60xf32>
    tpu.vector_store %arg5[%12, %c0_10, %c0_11], %11 {strides = array<i32>} : memref<2x60x60xf32, #tpu.memory_space<vmem>>, vector<2x60x60xf32>,
    %c1_i32 = arith.constant 1 : i32
    return
  }
  func.func @transform_0(%arg0: i32) -> (i32, i32, i32) {
    %c0_i32 = arith.constant 0 : i32
    %c0_i32_0 = arith.constant 0 : i32
    %c0_i32_1 = arith.constant 0 : i32
    return %arg0, %c0_i32, %c0_i32_0 : i32, i32, i32
  }
  func.func @transform_1(%arg0: i32) -> (i32, i32, i32) {
    %c0_i32 = arith.constant 0 : i32
    %c0_i32_0 = arith.constant 0 : i32
    %c0_i32_1 = arith.constant 0 : i32
    %c0_i32_2 = arith.constant 0 : i32
    return %c0_i32, %c0_i32_0, %c0_i32_1 : i32, i32, i32
  }
  func.func @transform_2(%arg0: i32) -> (i32, i32, i32) {
    %c0_i32 = arith.constant 0 : i32
    %c0_i32_0 = arith.constant 0 : i32
    %c0_i32_1 = arith.constant 0 : i32
    %c0_i32_2 = arith.constant 0 : i32
    return %c0_i32, %c0_i32_0, %c0_i32_1 : i32, i32, i32
  }
  func.func @transform_3(%arg0: i32) -> (i32, i32) {
    %c0_i32 = arith.constant 0 : i32
    %c0_i32_0 = arith.constant 0 : i32
    %c0_i32_1 = arith.constant 0 : i32
    return %c0_i32, %c0_i32_0 : i32, i32
  }
  func.func @transform_4(%arg0: i32) -> (i32, i32, i32) {
    %c0_i32 = arith.constant 0 : i32
    %c0_i32_0 = arith.constant 0 : i32
    %c0_i32_1 = arith.constant 0 : i32
    return %arg0, %c0_i32, %c0_i32_0 : i32, i32, i32
  }
}

</mosaic_0001>

<llo_original>
// kernel: cnn_forward.1
$region0: #{cnn_forward.1}
  #allocation0 [shape = 'u32[]', space=smem, size = 0x4, offset = 0x4, fixed_abs, tag = 'smem constant byte address 0x4 - core index']
  #allocation1 [shape = 'u32[144,128]{1,0:T(1,128)}', space=vmem, size = 0x12000, scoped, tag = 'internal scratch']
  %s0 = inlined_call_operand.vmem [shape: f32[2,60,60], index: 0, kind: input, shape index: {}]
  %s1 = inlined_call_operand.vmem [shape: f32[2,60,60], index: 1, kind: input, shape index: {}]
  %s2 = inlined_call_operand.vmem [shape: f32[2,60,60], index: 2, kind: input, shape index: {}]
  %s3 = inlined_call_operand.vmem [shape: f32[60,60], index: 3, kind: input, shape index: {}]
  %s4 = inlined_call_operand.vmem [shape: f32[2,60,60], index: 4, kind: output, shape index: {}]
  %s5 = sld [smem:[#allocation0]]
  $region26: #{cnn_forward.1} parent=0
    _
  %s7 = ssub.s32 1, %s5
  %s8 = scalar_select 0, %s7, %s5
  // Predicated region
  $region2: #{cnn_forward.1} parent=0 // pred_check
    _
  $region3: #{cnn_forward.1} parent=0 // pred_check_branch
    %10 = sbr.rel (0) target = $region5
  $region4: #{cnn_forward.1} parent=0 // pred_region
    _
  $region5: #{cnn_forward.1} parent=0 // pred_fallthru
    _
  // Predicated region
  $region6: #{cnn_forward.1} parent=0 // pred_check
    _
  $region7: #{cnn_forward.1} parent=0 // pred_check_branch
    %12 = sbr.rel (0) target = $region9
  $region8: #{cnn_forward.1} parent=0 // pred_region
    _
  $region9: #{cnn_forward.1} parent=0 // pred_fallthru
    _
  // Predicated region
  $region10: #{cnn_forward.1} parent=0 // pred_check
    _
  $region11: #{cnn_forward.1} parent=0 // pred_check_branch
    %14 = sbr.rel (0) target = $region13
  $region12: #{cnn_forward.1} parent=0 // pred_region
    _
  $region13: #{cnn_forward.1} parent=0 // pred_fallthru
    _
  // Predicated region
  $region14: #{cnn_forward.1} parent=0 // pred_check
    _
  $region15: #{cnn_forward.1} parent=0 // pred_check_branch
    %16 = sbr.rel (0) target = $region17
  $region16: #{cnn_forward.1} parent=0 // pred_region
    _
  $region17: #{cnn_forward.1} parent=0 // pred_fallthru
    _
  %v17 = vld [vmem:[%s1] sm:$0xff]
  %v18 = vld [vmem:[%s1 + $0x8] sm:$0xff]
  %v19 = vld [vmem:[%s1 + $0x10] sm:$0xff]
  %v20 = vld [vmem:[%s1 + $0x18] sm:$0xff]
  %v21 = vld [vmem:[%s1 + $0x20] sm:$0xff]
  %v22 = vld [vmem:[%s1 + $0x28] sm:$0xff]
  %v23 = vld [vmem:[%s1 + $0x30] sm:$0xff]
  %v24 = vld [vmem:[%s1 + $0x38] sm:$0xf]
  %v25 = vld [vmem:[%s1 + $0x40] sm:$0xff]
  %v26 = vld [vmem:[%s1 + $0x48] sm:$0xff]
  %v27 = vld [vmem:[%s1 + $0x50] sm:$0xff]
  %v28 = vld [vmem:[%s1 + $0x58] sm:$0xff]
  %v29 = vld [vmem:[%s1 + $0x60] sm:$0xff]
  %v30 = vld [vmem:[%s1 + $0x68] sm:$0xff]
  %v31 = vld [vmem:[%s1 + $0x70] sm:$0xff]
  %v32 = vld [vmem:[%s1 + $0x78] sm:$0xf]
  %v33 = vld [vmem:[%s2] sm:$0xff]
  %v34 = vld [vmem:[%s2 + $0x8] sm:$0xff]
  %v35 = vld [vmem:[%s2 + $0x10] sm:$0xff]
  %v36 = vld [vmem:[%s2 + $0x18] sm:$0xff]
  %v37 = vld [vmem:[%s2 + $0x20] sm:$0xff]
  %v38 = vld [vmem:[%s2 + $0x28] sm:$0xff]
  %v39 = vld [vmem:[%s2 + $0x30] sm:$0xff]
  %v40 = vld [vmem:[%s2 + $0x38] sm:$0xf]
  %v41 = vld [vmem:[%s2 + $0x40] sm:$0xff]
  %v42 = vld [vmem:[%s2 + $0x48] sm:$0xff]
  %v43 = vld [vmem:[%s2 + $0x50] sm:$0xff]
  %v44 = vld [vmem:[%s2 + $0x58] sm:$0xff]
  %v45 = vld [vmem:[%s2 + $0x60] sm:$0xff]
  %v46 = vld [vmem:[%s2 + $0x68] sm:$0xff]
  %v47 = vld [vmem:[%s2 + $0x70] sm:$0xff]
  %v48 = vld [vmem:[%s2 + $0x78] sm:$0xf]
  %v49 = vld [vmem:[%s3] sm:$0xff]
  %v50 = vld [vmem:[%s3 + $0x8] sm:$0xff]
  %v51 = vld [vmem:[%s3 + $0x10] sm:$0xff]
  %v52 = vld [vmem:[%s3 + $0x18] sm:$0xff]
  %v53 = vld [vmem:[%s3 + $0x20] sm:$0xff]
  %v54 = vld [vmem:[%s3 + $0x28] sm:$0xff]
  %v55 = vld [vmem:[%s3 + $0x30] sm:$0xff]
  %v56 = vld [vmem:[%s3 + $0x38] sm:$0xf]
  %s57 = smul.u32 0, 64
  %s58 = scalar_lea.vmem %s0, %s57
  %v59 = vld [vmem:[%s58] sm:$0xff]
  %v60 = vld [vmem:[%s58 + $0x8] sm:$0xff]
  %v61 = vld [vmem:[%s58 + $0x10] sm:$0xff]
  %v62 = vld [vmem:[%s58 + $0x18] sm:$0xff]
  %v63 = vld [vmem:[%s58 + $0x20] sm:$0xff]
  %v64 = vld [vmem:[%s58 + $0x28] sm:$0xff]
  %v65 = vld [vmem:[%s58 + $0x30] sm:$0xff]
  %v66 = vld [vmem:[%s58 + $0x38] sm:$0xf]
  %v67 = vld [vmem:[%s58 + $0x40] sm:$0xff]
  %v68 = vld [vmem:[%s58 + $0x48] sm:$0xff]
  %v69 = vld [vmem:[%s58 + $0x50] sm:$0xff]
  %v70 = vld [vmem:[%s58 + $0x58] sm:$0xff]
  %v71 = vld [vmem:[%s58 + $0x60] sm:$0xff]
  %v72 = vld [vmem:[%s58 + $0x68] sm:$0xff]
  %v73 = vld [vmem:[%s58 + $0x70] sm:$0xff]
  %v74 = vld [vmem:[%s58 + $0x78] sm:$0xf]
  %vm75 = vcmask 490496
  %v77 = vsel %vm75, %v17, 0
  %v80 = vsel %vm75, %v18, 0
  %v83 = vsel %vm75, %v19, 0
  %v86 = vsel %vm75, %v20, 0
  %v89 = vsel %vm75, %v21, 0
  %v92 = vsel %vm75, %v22, 0
  %v95 = vsel %vm75, %v23, 0
  %v98 = vsel %vm75, %v24, 0
  %vm100 = vcmask 1043456
  %v102 = vsel %vm100, %v66, 0
  %104 = vmatprep.subr.mxu0 0.0
  %105 = vmatpush1.msra.mxu0 %v59
  %106 = vmatprep.subr.mxu0 0.0
  %107 = vmatpush1.msra.mxu0 %v60
  %108 = vmatprep.subr.mxu0 0.0
  %109 = vmatpush1.msra.mxu0 %v61
  %110 = vmatprep.subr.mxu0 0.0
  %111 = vmatpush1.msra.mxu0 %v62
  %112 = vmatprep.subr.mxu0 0.0
  %113 = vmatpush1.msra.mxu0 %v63
  %114 = vmatprep.subr.mxu0 0.0
  %115 = vmatpush1.msra.mxu0 %v64
  %116 = vmatprep.subr.mxu0 0.0
  %117 = vmatpush1.msra.mxu0 %v65
  %118 = vmatprep.subr.mxu0 0.0
  %119 = vmatpush1.msra.mxu0 %v102
  %120 = vmatprep.subr.mxu0 0.0
  %121 = vmatpush1.msra.mxu0 0.0
  %122 = vmatprep.subr.mxu0 0.0
  %123 = vmatpush1.msra.mxu0 0.0
  %124 = vmatprep.subr.mxu0 0.0
  %125 = vmatpush1.msra.mxu0 0.0
  %126 = vmatprep.subr.mxu0 0.0
  %127 = vmatpush1.msra.mxu0 0.0
  %128 = vmatprep.subr.mxu0 0.0
  %129 = vmatpush1.msra.mxu0 0.0
  %130 = vmatprep.subr.mxu0 0.0
  %131 = vmatpush1.msra.mxu0 0.0
  %132 = vmatprep.subr.mxu0 0.0
  %133 = vmatpush1.msra.mxu0 0.0
  %134 = vmatprep.subr.mxu0 0.0
  %135 = vmatpush1.msra.mxu0 0.0
  %136 = vmatprep.subr.mxu0 0.0
  %137 = vmatpush1.msra.mxu0 0.0
  %138 = vmatprep.subr.mxu0 0.0
  %139 = vmatpush1.msra.mxu0 0.0
  %140 = vmatprep.subr.mxu0 0.0
  %141 = vmatpush1.msra.mxu0 0.0
  %142 = vmatprep.subr.mxu0 0.0
  %143 = vmatpush1.msra.mxu0 0.0
  %144 = vmatprep.subr.mxu0 0.0
  %145 = vmatpush1.msra.mxu0 0.0
  %146 = vmatprep.subr.mxu0 0.0
  %147 = vmatpush1.msra.mxu0 0.0
  %148 = vmatprep.subr.mxu0 0.0
  %149 = vmatpush1.msra.mxu0 0.0
  %150 = vmatprep.subr.mxu0 0.0
  %151 = vmatpush1.msra.mxu0 0.0
  %152 = vmatprep.subr.mxu0 0.0
  %153 = vmatpush1.msra.mxu0 0.0
  %154 = vmatprep.subr.mxu0 0.0
  %155 = vmatpush1.msra.mxu0 0.0
  %156 = vmatprep.subr.mxu0 0.0
  %157 = vmatpush1.msra.mxu0 0.0
  %158 = vmatprep.subr.mxu0 0.0
  %159 = vmatpush1.msra.mxu0 0.0
  %160 = vmatprep.subr.mxu0 0.0
  %161 = vmatpush1.msra.mxu0 0.0
  %162 = vmatprep.subr.mxu0 0.0
  %163 = vmatpush1.msra.mxu0 0.0
  %164 = vmatprep.subr.mxu0 0.0
  %165 = vmatpush1.msra.mxu0 0.0
  %166 = vmatprep.subr.mxu0 0.0
  %167 = vmatpush1.msra.mxu0 0.0
  %168 = vmatprep.mubr.f32.mxu0 0.0
  %169 = vmatmul.mubr.f32.gmra.mrb[0].mxu0 %v77
  %v170 = vpop.f32.mrb[0].mxu0
  %v171 = vadd.f32 0.0, %v170
  %v172 = vpop.f32.mrb[0].mxu0
  %173 = vmatprep.mubr.f32.mxu0 0.0
  %174 = vmatmul.mubr.f32.gmra.mrb[0].mxu0 %v80
  %v175 = vpop.f32.mrb[0].mxu0
  %v176 = vadd.f32 0.0, %v175
  %v177 = vpop.f32.mrb[0].mxu0
  %178 = vmatprep.mubr.f32.mxu0 0.0
  %179 = vmatmul.mubr.f32.gmra.mrb[0].mxu0 %v83
  %v180 = vpop.f32.mrb[0].mxu0
  %v181 = vadd.f32 0.0, %v180
  %v182 = vpop.f32.mrb[0].mxu0
  %183 = vmatprep.mubr.f32.mxu0 0.0
  %184 = vmatmul.mubr.f32.gmra.mrb[0].mxu0 %v86
  %v185 = vpop.f32.mrb[0].mxu0
  %v186 = vadd.f32 0.0, %v185
  %v187 = vpop.f32.mrb[0].mxu0
  %188 = vmatprep.mubr.f32.mxu0 0.0
  %189 = vmatmul.mubr.f32.gmra.mrb[0].mxu0 %v89
  %v190 = vpop.f32.mrb[0].mxu0
  %v191 = vadd.f32 0.0, %v190
  %v192 = vpop.f32.mrb[0].mxu0
  %193 = vmatprep.mubr.f32.mxu0 0.0
  %194 = vmatmul.mubr.f32.gmra.mrb[0].mxu0 %v92
  %v195 = vpop.f32.mrb[0].mxu0
  %v196 = vadd.f32 0.0, %v195
  %v197 = vpop.f32.mrb[0].mxu0
  %198 = vmatprep.mubr.f32.mxu0 0.0
  %199 = vmatmul.mubr.f32.gmra.mrb[0].mxu0 %v95
  %v200 = vpop.f32.mrb[0].mxu0
  %v201 = vadd.f32 0.0, %v200
  %v202 = vpop.f32.mrb[0].mxu0
  %203 = vmatprep.mubr.f32.mxu0 0.0
  %204 = vmatmul.mubr.f32.gmra.mrb[0].mxu0 %v98
  %v205 = vpop.f32.mrb[0].mxu0
  %v206 = vadd.f32 0.0, %v205
  %v207 = vpop.f32.mrb[0].mxu0
  %208 = vdwg.mxu0
  %v210 = vsel %vm75, %v25, 0
  %v213 = vsel %vm75, %v26, 0
  %v216 = vsel %vm75, %v27, 0
  %v219 = vsel %vm75, %v28, 0
  %v222 = vsel %vm75, %v29, 0
  %v225 = vsel %vm75, %v30, 0
  %v228 = vsel %vm75, %v31, 0
  %v231 = vsel %vm75, %v32, 0
  %v234 = vsel %vm100, %v74, 0
  %236 = vmatprep.subr.mxu0 0.0
  %237 = vmatpush1.msra.mxu0 %v67
  %238 = vmatprep.subr.mxu0 0.0
  %239 = vmatpush1.msra.mxu0 %v68
  %240 = vmatprep.subr.mxu0 0.0
  %241 = vmatpush1.msra.mxu0 %v69
  %242 = vmatprep.subr.mxu0 0.0
  %243 = vmatpush1.msra.mxu0 %v70
  %244 = vmatprep.subr.mxu0 0.0
  %245 = vmatpush1.msra.mxu0 %v71
  %246 = vmatprep.subr.mxu0 0.0
  %247 = vmatpush1.msra.mxu0 %v72
  %248 = vmatprep.subr.mxu0 0.0
  %249 = vmatpush1.msra.mxu0 %v73
  %250 = vmatprep.subr.mxu0 0.0
  %251 = vmatpush1.msra.mxu0 %v234
  %252 = vmatprep.subr.mxu0 0.0
  %253 = vmatpush1.msra.mxu0 0.0
  %254 = vmatprep.subr.mxu0 0.0
  %255 = vmatpush1.msra.mxu0 0.0
  %256 = vmatprep.subr.mxu0 0.0
  %257 = vmatpush1.msra.mxu0 0.0
  %258 = vmatprep.subr.mxu0 0.0
  %259 = vmatpush1.msra.mxu0 0.0
  %260 = vmatprep.subr.mxu0 0.0
  %261 = vmatpush1.msra.mxu0 0.0
  %262 = vmatprep.subr.mxu0 0.0
  %263 = vmatpush1.msra.mxu0 0.0
  %264 = vmatprep.subr.mxu0 0.0
  %265 = vmatpush1.msra.mxu0 0.0
  %266 = vmatprep.subr.mxu0 0.0
  %267 = vmatpush1.msra.mxu0 0.0
  %268 = vmatprep.subr.mxu0 0.0
  %269 = vmatpush1.msra.mxu0 0.0
  %270 = vmatprep.subr.mxu0 0.0
  %271 = vmatpush1.msra.mxu0 0.0
  %272 = vmatprep.subr.mxu0 0.0
  %273 = vmatpush1.msra.mxu0 0.0
  %274 = vmatprep.subr.mxu0 0.0
  %275 = vmatpush1.msra.mxu0 0.0
  %276 = vmatprep.subr.mxu0 0.0
  %277 = vmatpush1.msra.mxu0 0.0
  %278 = vmatprep.subr.mxu0 0.0
  %279 = vmatpush1.msra.mxu0 0.0
  %280 = vmatprep.subr.mxu0 0.0
  %281 = vmatpush1.msra.mxu0 0.0
  %282 = vmatprep.subr.mxu0 0.0
  %283 = vmatpush1.msra.mxu0 0.0
  %284 = vmatprep.subr.mxu0 0.0
  %285 = vmatpush1.msra.mxu0 0.0
  %286 = vmatprep.subr.mxu0 0.0
  %287 = vmatpush1.msra.mxu0 0.0
  %288 = vmatprep.subr.mxu0 0.0
  %289 = vmatpush1.msra.mxu0 0.0
  %290 = vmatprep.subr.mxu0 0.0
  %291 = vmatpush1.msra.mxu0 0.0
  %292 = vmatprep.subr.mxu0 0.0
  %293 = vmatpush1.msra.mxu0 0.0
  %294 = vmatprep.subr.mxu0 0.0
  %295 = vmatpush1.msra.mxu0 0.0
  %296 = vmatprep.subr.mxu0 0.0
  %297 = vmatpush1.msra.mxu0 0.0
  %298 = vmatprep.subr.mxu0 0.0
  %299 = vmatpush1.msra.mxu0 0.0
  %300 = vmatprep.mubr.f32.mxu0 0.0
  %301 = vmatmul.mubr.f32.gmra.mrb[0].mxu0 %v210
  %v302 = vpop.f32.mrb[0].mxu0
  %v303 = vadd.f32 0.0, %v302
  %v304 = vpop.f32.mrb[0].mxu0
  %305 = vmatprep.mubr.f32.mxu0 0.0
  %306 = vmatmul.mubr.f32.gmra.mrb[0].mxu0 %v213
  %v307 = vpop.f32.mrb[0].mxu0
  %v308 = vadd.f32 0.0, %v307
  %v309 = vpop.f32.mrb[0].mxu0
  %310 = vmatprep.mubr.f32.mxu0 0.0
  %311 = vmatmul.mubr.f32.gmra.mrb[0].mxu0 %v216
  %v312 = vpop.f32.mrb[0].mxu0
  %v313 = vadd.f32 0.0, %v312
  %v314 = vpop.f32.mrb[0].mxu0
  %315 = vmatprep.mubr.f32.mxu0 0.0
  %316 = vmatmul.mubr.f32.gmra.mrb[0].mxu0 %v219
  %v317 = vpop.f32.mrb[0].mxu0
  %v318 = vadd.f32 0.0, %v317
  %v319 = vpop.f32.mrb[0].mxu0
  %320 = vmatprep.mubr.f32.mxu0 0.0
  %321 = vmatmul.mubr.f32.gmra.mrb[0].mxu0 %v222
  %v322 = vpop.f32.mrb[0].mxu0
  %v323 = vadd.f32 0.0, %v322
  %v324 = vpop.f32.mrb[0].mxu0
  %325 = vmatprep.mubr.f32.mxu0 0.0
  %326 = vmatmul.mubr.f32.gmra.mrb[0].mxu0 %v225
  %v327 = vpop.f32.mrb[0].mxu0
  %v328 = vadd.f32 0.0, %v327
  %v329 = vpop.f32.mrb[0].mxu0
  %330 = vmatprep.mubr.f32.mxu0 0.0
  %331 = vmatmul.mubr.f32.gmra.mrb[0].mxu0 %v228
  %v332 = vpop.f32.mrb[0].mxu0
  %v333 = vadd.f32 0.0, %v332
  %v334 = vpop.f32.mrb[0].mxu0
  %335 = vmatprep.mubr.f32.mxu0 0.0
  %336 = vmatmul.mubr.f32.gmra.mrb[0].mxu0 %v231
  %v337 = vpop.f32.mrb[0].mxu0
  %v338 = vadd.f32 0.0, %v337
  %v339 = vpop.f32.mrb[0].mxu0
  %340 = vdwg.mxu0
  %v342 = vsel %vm75, %v171, 0
  %v345 = vsel %vm75, %v176, 0
  %v348 = vsel %vm75, %v181, 0
  %v351 = vsel %vm75, %v186, 0
  %v354 = vsel %vm75, %v191, 0
  %v357 = vsel %vm75, %v196, 0
  %v360 = vsel %vm75, %v201, 0
  %v363 = vsel %vm75, %v206, 0
  %v366 = vsel %vm100, %v40, 0
  %368 = vmatprep.subr.mxu0 0.0
  %369 = vmatpush1.msra.mxu0 %v33
  %370 = vmatprep.subr.mxu0 0.0
  %371 = vmatpush1.msra.mxu0 %v34
  %372 = vmatprep.subr.mxu0 0.0
  %373 = vmatpush1.msra.mxu0 %v35
  %374 = vmatprep.subr.mxu0 0.0
  %375 = vmatpush1.msra.mxu0 %v36
  %376 = vmatprep.subr.mxu0 0.0
  %377 = vmatpush1.msra.mxu0 %v37
  %378 = vmatprep.subr.mxu0 0.0
  %379 = vmatpush1.msra.mxu0 %v38
  %380 = vmatprep.subr.mxu0 0.0
  %381 = vmatpush1.msra.mxu0 %v39
  %382 = vmatprep.subr.mxu0 0.0
  %383 = vmatpush1.msra.mxu0 %v366
  %384 = vmatprep.subr.mxu0 0.0
  %385 = vmatpush1.msra.mxu0 0.0
  %386 = vmatprep.subr.mxu0 0.0
  %387 = vmatpush1.msra.mxu0 0.0
  %388 = vmatprep.subr.mxu0 0.0
  %389 = vmatpush1.msra.mxu0 0.0
  %390 = vmatprep.subr.mxu0 0.0
  %391 = vmatpush1.msra.mxu0 0.0
  %392 = vmatprep.subr.mxu0 0.0
  %393 = vmatpush1.msra.mxu0 0.0
  %394 = vmatprep.subr.mxu0 0.0
  %395 = vmatpush1.msra.mxu0 0.0
  %396 = vmatprep.subr.mxu0 0.0
  %397 = vmatpush1.msra.mxu0 0.0
  %398 = vmatprep.subr.mxu0 0.0
  %399 = vmatpush1.msra.mxu0 0.0
  %400 = vmatprep.subr.mxu0 0.0
  %401 = vmatpush1.msra.mxu0 0.0
  %402 = vmatprep.subr.mxu0 0.0
  %403 = vmatpush1.msra.mxu0 0.0
  %404 = vmatprep.subr.mxu0 0.0
  %405 = vmatpush1.msra.mxu0 0.0
  %406 = vmatprep.subr.mxu0 0.0
  %407 = vmatpush1.msra.mxu0 0.0
  %408 = vmatprep.subr.mxu0 0.0
  %409 = vmatpush1.msra.mxu0 0.0
  %410 = vmatprep.subr.mxu0 0.0
  %411 = vmatpush1.msra.mxu0 0.0
  %412 = vmatprep.subr.mxu0 0.0
  %413 = vmatpush1.msra.mxu0 0.0
  %414 = vmatprep.subr.mxu0 0.0
  %415 = vmatpush1.msra.mxu0 0.0
  %416 = vmatprep.subr.mxu0 0.0
  %417 = vmatpush1.msra.mxu0 0.0
  %418 = vmatprep.subr.mxu0 0.0
  %419 = vmatpush1.msra.mxu0 0.0
  %420 = vmatprep.subr.mxu0 0.0
  %421 = vmatpush1.msra.mxu0 0.0
  %422 = vmatprep.subr.mxu0 0.0
  %423 = vmatpush1.msra.mxu0 0.0
  %424 = vmatprep.subr.mxu0 0.0
  %425 = vmatpush1.msra.mxu0 0.0
  %426 = vmatprep.subr.mxu0 0.0
  %427 = vmatpush1.msra.mxu0 0.0
  %428 = vmatprep.subr.mxu0 0.0
  %429 = vmatpush1.msra.mxu0 0.0
  %430 = vmatprep.subr.mxu0 0.0
  %431 = vmatpush1.msra.mxu0 0.0
  %432 = vmatprep.mubr.f32.mxu0 0.0
  %433 = vmatmul.mubr.f32.gmra.mrb[0].mxu0 %v342
  %v434 = vpop.f32.mrb[0].mxu0
  %v435 = vadd.f32 %v49, %v434
  %v436 = vpop.f32.mrb[0].mxu0
  %437 = vmatprep.mubr.f32.mxu0 0.0
  %438 = vmatmul.mubr.f32.gmra.mrb[0].mxu0 %v345
  %v439 = vpop.f32.mrb[0].mxu0
  %v440 = vadd.f32 %v50, %v439
  %v441 = vpop.f32.mrb[0].mxu0
  %442 = vmatprep.mubr.f32.mxu0 0.0
  %443 = vmatmul.mubr.f32.gmra.mrb[0].mxu0 %v348
  %v444 = vpop.f32.mrb[0].mxu0
  %v445 = vadd.f32 %v51, %v444
  %v446 = vpop.f32.mrb[0].mxu0
  %447 = vmatprep.mubr.f32.mxu0 0.0
  %448 = vmatmul.mubr.f32.gmra.mrb[0].mxu0 %v351
  %v449 = vpop.f32.mrb[0].mxu0
  %v450 = vadd.f32 %v52, %v449
  %v451 = vpop.f32.mrb[0].mxu0
  %452 = vmatprep.mubr.f32.mxu0 0.0
  %453 = vmatmul.mubr.f32.gmra.mrb[0].mxu0 %v354
  %v454 = vpop.f32.mrb[0].mxu0
  %v455 = vadd.f32 %v53, %v454
  %v456 = vpop.f32.mrb[0].mxu0
  %457 = vmatprep.mubr.f32.mxu0 0.0
  %458 = vmatmul.mubr.f32.gmra.mrb[0].mxu0 %v357
  %v459 = vpop.f32.mrb[0].mxu0
  %v460 = vadd.f32 %v54, %v459
  %v461 = vpop.f32.mrb[0].mxu0
  %462 = vmatprep.mubr.f32.mxu0 0.0
  %463 = vmatmul.mubr.f32.gmra.mrb[0].mxu0 %v360
  %v464 = vpop.f32.mrb[0].mxu0
  %v465 = vadd.f32 %v55, %v464
  %v466 = vpop.f32.mrb[0].mxu0
  %467 = vmatprep.mubr.f32.mxu0 0.0
  %468 = vmatmul.mubr.f32.gmra.mrb[0].mxu0 %v363
  %v469 = vpop.f32.mrb[0].mxu0
  %v470 = vadd.f32 %v56, %v469
  %v471 = vpop.f32.mrb[0].mxu0
  %472 = vdwg.mxu0
  %v474 = vsel %vm75, %v303, 0
  %v477 = vsel %vm75, %v308, 0
  %v480 = vsel %vm75, %v313, 0
  %v483 = vsel %vm75, %v318, 0
  %v486 = vsel %vm75, %v323, 0
  %v489 = vsel %vm75, %v328, 0
  %v492 = vsel %vm75, %v333, 0
  %v495 = vsel %vm75, %v338, 0
  %v498 = vsel %vm100, %v48, 0
  %500 = vmatprep.subr.mxu0 0.0
  %501 = vmatpush1.msra.mxu0 %v41
  %502 = vmatprep.subr.mxu0 0.0
  %503 = vmatpush1.msra.mxu0 %v42
  %504 = vmatprep.subr.mxu0 0.0
  %505 = vmatpush1.msra.mxu0 %v43
  %506 = vmatprep.subr.mxu0 0.0
  %507 = vmatpush1.msra.mxu0 %v44
  %508 = vmatprep.subr.mxu0 0.0
  %509 = vmatpush1.msra.mxu0 %v45
  %510 = vmatprep.subr.mxu0 0.0
  %511 = vmatpush1.msra.mxu0 %v46
  %512 = vmatprep.subr.mxu0 0.0
  %513 = vmatpush1.msra.mxu0 %v47
  %514 = vmatprep.subr.mxu0 0.0
  %515 = vmatpush1.msra.mxu0 %v498
  %516 = vmatprep.subr.mxu0 0.0
  %517 = vmatpush1.msra.mxu0 0.0
  %518 = vmatprep.subr.mxu0 0.0
  %519 = vmatpush1.msra.mxu0 0.0
  %520 = vmatprep.subr.mxu0 0.0
  %521 = vmatpush1.msra.mxu0 0.0
  %522 = vmatprep.subr.mxu0 0.0
  %523 = vmatpush1.msra.mxu0 0.0
  %524 = vmatprep.subr.mxu0 0.0
  %525 = vmatpush1.msra.mxu0 0.0
  %526 = vmatprep.subr.mxu0 0.0
  %527 = vmatpush1.msra.mxu0 0.0
  %528 = vmatprep.subr.mxu0 0.0
  %529 = vmatpush1.msra.mxu0 0.0
  %530 = vmatprep.subr.mxu0 0.0
  %531 = vmatpush1.msra.mxu0 0.0
  %532 = vmatprep.subr.mxu0 0.0
  %533 = vmatpush1.msra.mxu0 0.0
  %534 = vmatprep.subr.mxu0 0.0
  %535 = vmatpush1.msra.mxu0 0.0
  %536 = vmatprep.subr.mxu0 0.0
  %537 = vmatpush1.msra.mxu0 0.0
  %538 = vmatprep.subr.mxu0 0.0
  %539 = vmatpush1.msra.mxu0 0.0
  %540 = vmatprep.subr.mxu0 0.0
  %541 = vmatpush1.msra.mxu0 0.0
  %542 = vmatprep.subr.mxu0 0.0
  %543 = vmatpush1.msra.mxu0 0.0
  %544 = vmatprep.subr.mxu0 0.0
  %545 = vmatpush1.msra.mxu0 0.0
  %546 = vmatprep.subr.mxu0 0.0
  %547 = vmatpush1.msra.mxu0 0.0
  %548 = vmatprep.subr.mxu0 0.0
  %549 = vmatpush1.msra.mxu0 0.0
  %550 = vmatprep.subr.mxu0 0.0
  %551 = vmatpush1.msra.mxu0 0.0
  %552 = vmatprep.subr.mxu0 0.0
  %553 = vmatpush1.msra.mxu0 0.0
  %554 = vmatprep.subr.mxu0 0.0
  %555 = vmatpush1.msra.mxu0 0.0
  %556 = vmatprep.subr.mxu0 0.0
  %557 = vmatpush1.msra.mxu0 0.0
  %558 = vmatprep.subr.mxu0 0.0
  %559 = vmatpush1.msra.mxu0 0.0
  %560 = vmatprep.subr.mxu0 0.0
  %561 = vmatpush1.msra.mxu0 0.0
  %562 = vmatprep.subr.mxu0 0.0
  %563 = vmatpush1.msra.mxu0 0.0
  %564 = vmatprep.mubr.f32.mxu0 0.0
  %565 = vmatmul.mubr.f32.gmra.mrb[0].mxu0 %v474
  %v566 = vpop.f32.mrb[0].mxu0
  %v567 = vadd.f32 %v49, %v566
  %v568 = vpop.f32.mrb[0].mxu0
  %569 = vmatprep.mubr.f32.mxu0 0.0
  %570 = vmatmul.mubr.f32.gmra.mrb[0].mxu0 %v477
  %v571 = vpop.f32.mrb[0].mxu0
  %v572 = vadd.f32 %v50, %v571
  %v573 = vpop.f32.mrb[0].mxu0
  %574 = vmatprep.mubr.f32.mxu0 0.0
  %575 = vmatmul.mubr.f32.gmra.mrb[0].mxu0 %v480
  %v576 = vpop.f32.mrb[0].mxu0
  %v577 = vadd.f32 %v51, %v576
  %v578 = vpop.f32.mrb[0].mxu0
  %579 = vmatprep.mubr.f32.mxu0 0.0
  %580 = vmatmul.mubr.f32.gmra.mrb[0].mxu0 %v483
  %v581 = vpop.f32.mrb[0].mxu0
  %v582 = vadd.f32 %v52, %v581
  %v583 = vpop.f32.mrb[0].mxu0
  %584 = vmatprep.mubr.f32.mxu0 0.0
  %585 = vmatmul.mubr.f32.gmra.mrb[0].mxu0 %v486
  %v586 = vpop.f32.mrb[0].mxu0
  %v587 = vadd.f32 %v53, %v586
  %v588 = vpop.f32.mrb[0].mxu0
  %589 = vmatprep.mubr.f32.mxu0 0.0
  %590 = vmatmul.mubr.f32.gmra.mrb[0].mxu0 %v489
  %v591 = vpop.f32.mrb[0].mxu0
  %v592 = vadd.f32 %v54, %v591
  %v593 = vpop.f32.mrb[0].mxu0
  %594 = vmatprep.mubr.f32.mxu0 0.0
  %595 = vmatmul.mubr.f32.gmra.mrb[0].mxu0 %v492
  %v596 = vpop.f32.mrb[0].mxu0
  %v597 = vadd.f32 %v55, %v596
  %v598 = vpop.f32.mrb[0].mxu0
  %599 = vmatprep.mubr.f32.mxu0 0.0
  %600 = vmatmul.mubr.f32.gmra.mrb[0].mxu0 %v495
  %v601 = vpop.f32.mrb[0].mxu0
  %v602 = vadd.f32 %v56, %v601
  %v603 = vpop.f32.mrb[0].mxu0
  %604 = vdwg.mxu0
  %s605 = scalar_lea.vmem %s4, %s57
  %606 = vst.msk [vmem:[%s605] sm:$0xff] %vm75, %v435
  %607 = vst.msk [vmem:[%s605 + $0x8] sm:$0xff] %vm75, %v440
  %608 = vst.msk [vmem:[%s605 + $0x10] sm:$0xff] %vm75, %v445
  %609 = vst.msk [vmem:[%s605 + $0x18] sm:$0xff] %vm75, %v450
  %610 = vst.msk [vmem:[%s605 + $0x20] sm:$0xff] %vm75, %v455
  %611 = vst.msk [vmem:[%s605 + $0x28] sm:$0xff] %vm75, %v460
  %612 = vst.msk [vmem:[%s605 + $0x30] sm:$0xff] %vm75, %v465
  %vm613 = vcmask 486400
  %614 = vst.msk [vmem:[%s605 + $0x38] sm:$0xf] %vm613, %v470
  %615 = vst.msk [vmem:[%s605 + $0x40] sm:$0xff] %vm75, %v567
  %616 = vst.msk [vmem:[%s605 + $0x48] sm:$0xff] %vm75, %v572
  %617 = vst.msk [vmem:[%s605 + $0x50] sm:$0xff] %vm75, %v577
  %618 = vst.msk [vmem:[%s605 + $0x58] sm:$0xff] %vm75, %v582
  %619 = vst.msk [vmem:[%s605 + $0x60] sm:$0xff] %vm75, %v587
  %620 = vst.msk [vmem:[%s605 + $0x68] sm:$0xff] %vm75, %v592
  %621 = vst.msk [vmem:[%s605 + $0x70] sm:$0xff] %vm75, %v597
  %622 = vst.msk [vmem:[%s605 + $0x78] sm:$0xf] %vm613, %v602
  // Predicated region
  $region18: #{cnn_forward.1} parent=0 // pred_check
    _
  $region19: #{cnn_forward.1} parent=0 // pred_check_branch
    %624 = sbr.rel (0) target = $region21
  $region20: #{cnn_forward.1} parent=0 // pred_region
    _
  $region21: #{cnn_forward.1} parent=0 // pred_fallthru
    _
  // Predicated region
  $region22: #{cnn_forward.1} parent=0 // pred_check
    _
  $region23: #{cnn_forward.1} parent=0 // pred_check_branch
    %626 = sbr.rel (0) target = $region25
  $region24: #{cnn_forward.1} parent=0 // pred_region
    _
  $region25: #{cnn_forward.1} parent=0 // pred_fallthru
    _

</llo_original>
